<compile_context>
chip_gen: v7x
topology: tpu7x:2x2x1
jax: 0.10.0
libtpu: 0.0.40
codegen_flags: <defaults>
</compile_context>

<pallas_src>
import math

import jax
import jax.numpy as jnp
from jax.experimental import pallas as pl
from jax.experimental.pallas import tpu as pltpu

LANE = 128       # lane width (last dim)
SUBLANE = 8      # sublane width (second-to-last dim)
MAX_TB = 512     # ~85% of HBM roofline already at 512-row tiles

VMEM_LIMIT_BYTES = 48 * 1024 * 1024   # requested scoped VMEM (safe on v5e/v6e/v7x)
VMEM_BUDGET_BYTES = 36 * 1024 * 1024  # what tb sizing is allowed to plan for (headroom)


def _cdiv(a, b):
    return -(-a // b)


def _round_up(n, m):
    return ((n + m - 1) // m) * m


def _pad2d(a, rows, cols):
    r, c = a.shape
    if r == rows and c == cols:
        return a
    return jnp.pad(a, ((0, rows - r), (0, cols - c)))


# ---------------------------------------------------------------------------
# Kernel
# ---------------------------------------------------------------------------
def _make_mlp5_kernel(offdiag):
    """Fused 5-layer MLP kernel operating on one batch tile (rows on sublanes)."""

    def _tail(h, w2_ref, b2_ref, w3_ref, b3_ref, w4_ref, b4_ref,
              w5_ref, b5_ref, o_ref):
        # layers 2..4: Linear -> ReLU (bf16 MXU, f32 accumulate / elementwise)
        for w_ref, b_ref in ((w2_ref, b2_ref), (w3_ref, b3_ref), (w4_ref, b4_ref)):
            h = jnp.dot(h.astype(jnp.bfloat16), w_ref[...],
                        preferred_element_type=jnp.float32)
            h = jnp.maximum(h + b_ref[...], 0.0)
        # layer 5 (no activation)
        o = jnp.dot(h.astype(jnp.bfloat16), w5_ref[...],
                    preferred_element_type=jnp.float32)
        o_ref[...] = (o + b5_ref[...]).astype(o_ref.dtype)

    if offdiag:
        def kernel(xa_ref, xb_ref, w1a_ref, w1b_ref, b1_ref,
                   w2_ref, b2_ref, w3_ref, b3_ref, w4_ref, b4_ref,
                   w5_ref, b5_ref, o_ref):
            # layer1 on the implicit concat [x[:-1], x[1:]] without materializing it:
            #   h = x[:-1] @ W1[:F] + x[1:] @ W1[F:] + b1
            h = jnp.dot(xa_ref[...], w1a_ref[...], preferred_element_type=jnp.float32)
            h = h + jnp.dot(xb_ref[...], w1b_ref[...], preferred_element_type=jnp.float32)
            h = jnp.maximum(h + b1_ref[...], 0.0)
            _tail(h, w2_ref, b2_ref, w3_ref, b3_ref, w4_ref, b4_ref,
                  w5_ref, b5_ref, o_ref)
    else:
        def kernel(x_ref, w1_ref, b1_ref,
                   w2_ref, b2_ref, w3_ref, b3_ref, w4_ref, b4_ref,
                   w5_ref, b5_ref, o_ref):
            h = jnp.dot(x_ref[...], w1_ref[...], preferred_element_type=jnp.float32)
            h = jnp.maximum(h + b1_ref[...], 0.0)
            _tail(h, w2_ref, b2_ref, w3_ref, b3_ref, w4_ref, b4_ref,
                  w5_ref, b5_ref, o_ref)

    return kernel


# ---------------------------------------------------------------------------
# Wrapper
# ---------------------------------------------------------------------------
def nn_5l_new_forward(x, params, offdiag=False, diag_drift=False):
    """Forward pass matching NN_5l_new.forward.

    params: 5 pairs (w, b); w pre-transposed to (in, out), b of shape (1, out),
    float32 (weights are cast to bf16 for the MXU; accumulation stays f32).
    """
    (w1, b1), (w2, b2), (w3, b3), (w4, b4), (w5, b5) = params

    # The streamed activations go to the kernel in bf16 (the kernel rounded them
    # before the MXU anyway) -> half the dominant HBM stream.
    x = jnp.asarray(x, jnp.float32).astype(jnp.bfloat16)

    if diag_drift:
        # x <- cat([zeros, x, zeros], 0); x <- cat([x[:-2], x[1:-1], x[2:]], 1)
        # TODO(synk): do this 3-way row-shift inside the kernel with a 1-row halo
        # per tile (manual DMA) so x is streamed once instead of 3x.
        z = jnp.zeros((1, x.shape[1]), x.dtype)
        xz = jnp.concatenate([z, x, z], axis=0)
        x = jnp.concatenate([xz[:-2], xz[1:-1], xz[2:]], axis=1)

    B, width = x.shape
    m1, m2, m3, m4 = w1.shape[1], w2.shape[1], w3.shape[1], w4.shape[1]
    d_out = w5.shape[1]
    assert w2.shape[0] == m1 and w3.shape[0] == m2 and w5.shape[0] == m4
    # The original module needs middle_dims[2] == middle_dims[3] at runtime.
    assert w3.shape[1] == w4.shape[0], "NN_5l_new requires middle_dims[2] == middle_dims[3]"

    if offdiag:
        assert w1.shape[0] == 2 * width, "offdiag needs layer1 in_dim == 2 * feature_dim"
        b_eff = B - 1
    else:
        assert w1.shape[0] == width
        b_eff = B

    if b_eff <= 0:
        return jnp.zeros((max(b_eff, 0), d_out), jnp.float32)

    # --- hidden dims padded to lane multiples; x feature dim and d_out are NOT
    #     padded (blocks whose last dim equals the full array dim are legal) ----
    m1_p, m2_p, m3_p, m4_p = (_round_up(m, LANE) for m in (m1, m2, m3, m4))

    def padw(w, r, c):   # bf16 weights, zero-padded
        return _pad2d(jnp.asarray(w, jnp.float32), r, c).astype(jnp.bfloat16)

    def padb(b, c):      # f32 biases, zero-padded
        return _pad2d(jnp.asarray(b, jnp.float32).reshape(1, -1), 1, c)

    b1p = padb(b1, m1_p)
    w2p, b2p = padw(w2, m1_p, m2_p), padb(b2, m2_p)
    w3p, b3p = padw(w3, m2_p, m3_p), padb(b3, m3_p)
    w4p, b4p = padw(w4, m3_p, m4_p), padb(b4, m4_p)
    w5p, b5p = padw(w5, m4_p, d_out), padb(b5, d_out)   # output columns unpadded

    if offdiag:
        w1a = padw(w1[:width], width, m1_p)             # K dim (width) unpadded
        w1b = padw(w1[width:], width, m1_p)
        w_ops = (w1a, w1b, b1p, w2p, b2p, w3p, b3p, w4p, b4p, w5p, b5p)
        n_x_streams = 2
    else:
        w1p = padw(w1, width, m1_p)
        w_ops = (w1p, b1p, w2p, b2p, w3p, b3p, w4p, b4p, w5p, b5p)
        n_x_streams = 1

    # --- batch tile size from an explicit VMEM budget ------------------------
    # resident weights/biases (double-buffered by the default pipeline even with
    # a constant index_map) + per-row streamed / temporary bytes.
    resident_bytes = 2 * sum(int(a.size) * a.dtype.itemsize for a in w_ops)
    row_bytes = (2 * n_x_streams * width * 2          # bf16 x streams, double-buffered
                 + 2 * d_out * 4                      # f32 out stream, double-buffered
                 + 4 * (m1_p + m2_p + m3_p + m4_p))   # f32 intermediates (over-estimate)
    tb = max(VMEM_BUDGET_BYTES - resident_bytes, SUBLANE * row_bytes) // row_bytes
    tb = max(SUBLANE, (tb // SUBLANE) * SUBLANE)
    tb = min(tb, MAX_TB)

    # On multi-TensorCore chips make sure the "parallel" batch axis has >= 2
    # steps so both cores get work; on single-TC v5e/v6e keep tb maximal
    # (splitting there only adds per-step overhead).
    kind = jax.devices()[0].device_kind.lower()
    single_tc = ("v5e" in kind) or ("v5 lite" in kind) or ("v6e" in kind) or ("v6 lite" in kind)
    if (not single_tc) and b_eff > SUBLANE:
        tb = min(tb, _round_up(_cdiv(b_eff, 2), SUBLANE))

    # Re-balance tiles so batch padding waste is < 8 rows per tile.
    n_tiles = _cdiv(b_eff, tb)
    tb = _round_up(_cdiv(b_eff, n_tiles), SUBLANE)
    b_pad = n_tiles * tb

    # --- streamed x operands (bf16 cast already done; pad is at most a few rows)
    if offdiag:
        xa = _pad2d(x[:-1], b_pad, width)
        xb = _pad2d(x[1:], b_pad, width)
        x_ops = (xa, xb)
    else:
        x_ops = (_pad2d(x, b_pad, width),)

    def row_spec(cols):            # batch-tiled, software-pipelined stream
        return pl.BlockSpec((tb, cols), lambda i: (i, 0))

    def full_spec(shape):          # VMEM-resident across all grid steps
        return pl.BlockSpec(shape, lambda i: (0, 0))

    in_specs = [row_spec(width) for _ in x_ops] + [full_spec(op.shape) for op in w_ops]
    operands = (*x_ops, *w_ops)

    flops = 2 * b_pad * (n_x_streams * width * m1_p + m1_p * m2_p + m2_p * m3_p
                         + m3_p * m4_p + m4_p * d_out)
    bytes_accessed = (sum(int(a.size) * a.dtype.itemsize for a in operands)
                      + b_pad * d_out * 4)

    out = pl.pallas_call(
        _make_mlp5_kernel(offdiag),
        out_shape=jax.ShapeDtypeStruct((b_pad, d_out), jnp.float32),
        grid_spec=pl.GridSpec(
            grid=(n_tiles,),
            in_specs=in_specs,
            out_specs=pl.BlockSpec((tb, d_out), lambda i: (i, 0)),
        ),
        compiler_params=pltpu.CompilerParams(
            dimension_semantics=("parallel",),
            vmem_limit_bytes=VMEM_LIMIT_BYTES),
        cost_estimate=pl.CostEstimate(flops=flops, transcendentals=0,
                                      bytes_accessed=bytes_accessed),
    )(*operands)

    return out[:b_eff]


# ---------------------------------------------------------------------------
# Parameter init (nn.Linear defaults), stored transposed (in, out)
# ---------------------------------------------------------------------------
def init_nn_5l_params(key, input_dim, middle_dims, output_dim):
    dims_in = [input_dim, middle_dims[0], middle_dims[1], middle_dims[3], middle_dims[4]]
    dims_out = [middle_dims[0], middle_dims[1], middle_dims[2], middle_dims[4], output_dim]
    keys = jax.random.split(key, 2 * len(dims_in))
    params = []
    for i, (di, do) in enumerate(zip(dims_in, dims_out)):
        bound = 1.0 / math.sqrt(di)
        w = jax.random.uniform(keys[2 * i], (di, do), jnp.float32, -bound, bound)
        b = jax.random.uniform(keys[2 * i + 1], (1, do), jnp.float32, -bound, bound)
        params.append((w, b))
    return tuple(params)


# ---------------------------------------------------------------------------
# Pure-JAX reference (float32, mirrors the PyTorch forward exactly)
# ---------------------------------------------------------------------------
def _reference(x, params, offdiag=False, diag_drift=False):
    (w1, b1), (w2, b2), (w3, b3), (w4, b4), (w5, b5) = params
    x = jnp.asarray(x, jnp.float32)
    if diag_drift:
        z = jnp.zeros((1, x.shape[1]), x.dtype)
        xz = jnp.concatenate([z, x, z], axis=0)
        x = jnp.concatenate([xz[:-2], xz[1:-1], xz[2:]], axis=1)
    if offdiag:
        x = jnp.concatenate([x[:-1], x[1:]], axis=1)
    h = jnp.maximum(x @ w1 + b1, 0.0)
    h = jnp.maximum(h @ w2 + b2, 0.0)
    h = jnp.maximum(h @ w3 + b3, 0.0)
    h = jnp.maximum(h @ w4 + b4, 0.0)
    return h @ w5 + b5


if __name__ == "__main__":
    key = jax.random.PRNGKey(0)
    kx, k1, k2, k3, k4 = jax.random.split(key, 5)

    B, F, O = 16, 16, 8
    middle_dims = [32, 48, 48, 48, 32]   # module requires middle_dims[2] == middle_dims[3]
    x = jax.random.normal(kx, (B, F), jnp.float32)

    # tolerance is loose-ish because the kernel uses bf16 weights/activations
    # on the MXU (f32 accumulation).
    TOL = dict(atol=5e-2, rtol=5e-2)

    # --- plain ---
    p = init_nn_5l_params(k1, F, middle_dims, O)
    out = nn_5l_new_forward(x, p)
    jax.block_until_ready(out)
    ref = _reference(x, p)
    assert out.shape == (B, O)
    assert jnp.allclose(out, ref, **TOL), float(jnp.max(jnp.abs(out - ref)))

    # --- offdiag: layer1 in_dim = 2F, output has B-1 rows ---
    p_od = init_nn_5l_params(k2, 2 * F, middle_dims, O)
    out_od = nn_5l_new_forward(x, p_od, offdiag=True)
    jax.block_until_ready(out_od)
    ref_od = _reference(x, p_od, offdiag=True)
    assert out_od.shape == (B - 1, O)
    assert jnp.allclose(out_od, ref_od, **TOL), float(jnp.max(jnp.abs(out_od - ref_od)))

    # --- diag_drift: layer1 in_dim = 3F ---
    p_dd = init_nn_5l_params(k3, 3 * F, middle_dims, O)
    out_dd = nn_5l_new_forward(x, p_dd, diag_drift=True)
    jax.block_until_ready(out_dd)
    ref_dd = _reference(x, p_dd, diag_drift=True)
    assert out_dd.shape == (B, O)
    assert jnp.allclose(out_dd, ref_dd, **TOL), float(jnp.max(jnp.abs(out_dd - ref_dd)))

    # --- both flags: layer1 in_dim = 2*3F, output has B-1 rows ---
    p_b = init_nn_5l_params(k4, 2 * 3 * F, middle_dims, O)
    out_b = nn_5l_new_forward(x, p_b, offdiag=True, diag_drift=True)
    jax.block_until_ready(out_b)
    ref_b = _reference(x, p_b, offdiag=True, diag_drift=True)
    assert out_b.shape == (B - 1, O)
    assert jnp.allclose(out_b, ref_b, **TOL), float(jnp.max(jnp.abs(out_b - ref_b)))

    print("KERNEL_OK")
</pallas_src>

<mosaic_0001>
module attributes {stable_mosaic.version = 11 : i64} {
  func.func @kernel(%arg0: i32, %arg1: memref<8x16xbf16, #tpu.memory_space<vmem>>, %arg2: memref<16x128xbf16, #tpu.memory_space<vmem>>, %arg3: memref<1x128xf32, #tpu.memory_space<vmem>>, %arg4: memref<128x128xbf16, #tpu.memory_space<vmem>>, %arg5: memref<1x128xf32, #tpu.memory_space<vmem>>, %arg6: memref<128x128xbf16, #tpu.memory_space<vmem>>, %arg7: memref<1x128xf32, #tpu.memory_space<vmem>>, %arg8: memref<128x128xbf16, #tpu.memory_space<vmem>>, %arg9: memref<1x128xf32, #tpu.memory_space<vmem>>, %arg10: memref<128x8xbf16, #tpu.memory_space<vmem>>, %arg11: memref<1x8xf32, #tpu.memory_space<vmem>>, %arg12: memref<8x8xf32, #tpu.memory_space<vmem>>) attributes {dimension_semantics = [#tpu.dimension_semantics<parallel>], iteration_bounds = array<i64: 2>, scalar_prefetch = 0 : i64, scratch_operands = 0 : i64, tpu.core_type = #tpu.core_type<tc>, window_params = [{transform_indices = @transform_0, window_bounds = array<i64: 8, 16>}, {pipeline_mode = #tpu.pipeline_mode<synchronous>, transform_indices = @transform_1, window_bounds = array<i64: 16, 128>}, {pipeline_mode = #tpu.pipeline_mode<synchronous>, transform_indices = @transform_2, window_bounds = array<i64: 1, 128>}, {pipeline_mode = #tpu.pipeline_mode<synchronous>, transform_indices = @transform_3, window_bounds = array<i64: 128, 128>}, {pipeline_mode = #tpu.pipeline_mode<synchronous>, transform_indices = @transform_4, window_bounds = array<i64: 1, 128>}, {pipeline_mode = #tpu.pipeline_mode<synchronous>, transform_indices = @transform_5, window_bounds = array<i64: 128, 128>}, {pipeline_mode = #tpu.pipeline_mode<synchronous>, transform_indices = @transform_6, window_bounds = array<i64: 1, 128>}, {pipeline_mode = #tpu.pipeline_mode<synchronous>, transform_indices = @transform_7, window_bounds = array<i64: 128, 128>}, {pipeline_mode = #tpu.pipeline_mode<synchronous>, transform_indices = @transform_8, window_bounds = array<i64: 1, 128>}, {pipeline_mode = #tpu.pipeline_mode<synchronous>, transform_indices = @transform_9, window_bounds = array<i64: 128, 8>}, {pipeline_mode = #tpu.pipeline_mode<synchronous>, transform_indices = @transform_10, window_bounds = array<i64: 1, 8>}, {transform_indices = @transform_11, window_bounds = array<i64: 8, 8>}]} {
    %c0 = arith.constant 0 : index
    %c0_0 = arith.constant 0 : index
    %0 = vector.load %arg1[%c0, %c0_0] : memref<8x16xbf16, #tpu.memory_space<vmem>>, vector<8x16xbf16>
    %c0_1 = arith.constant 0 : index
    %c0_2 = arith.constant 0 : index
    %1 = vector.load %arg2[%c0_1, %c0_2] : memref<16x128xbf16, #tpu.memory_space<vmem>>, vector<16x128xbf16>
    %cst = arith.constant dense<0.000000e+00> : vector<8x128xf32>
    %2 = tpu.matmul %0, %1, %cst {dimension_numbers = #tpu.dot_dimension_numbers<[1], [0], [0], [1], [0, 0, 1, 1], [], []>} : vector<8x16xbf16>, vector<16x128xbf16>, vector<8x128xf32> -> vector<8x128xf32>
    %c0_3 = arith.constant 0 : index
    %c0_4 = arith.constant 0 : index
    %3 = vector.load %arg3[%c0_3, %c0_4] : memref<1x128xf32, #tpu.memory_space<vmem>>, vector<1x128xf32>
    %4 = vector.broadcast %3 : vector<1x128xf32> to vector<8x128xf32>
    %5 = arith.addf %2, %4 : vector<8x128xf32>
    %cst_5 = arith.constant 0.000000e+00 : f32
    %6 = vector.broadcast %cst_5 : f32 to vector<8x128xf32>
    %7 = arith.maximumf %5, %6 : vector<8x128xf32>
    %8 = arith.truncf %7 : vector<8x128xf32> to vector<8x128xbf16>
    %c0_6 = arith.constant 0 : index
    %c0_7 = arith.constant 0 : index
    %9 = vector.load %arg4[%c0_6, %c0_7] : memref<128x128xbf16, #tpu.memory_space<vmem>>, vector<128x128xbf16>
    %cst_8 = arith.constant dense<0.000000e+00> : vector<8x128xf32>
    %10 = tpu.matmul %8, %9, %cst_8 {dimension_numbers = #tpu.dot_dimension_numbers<[1], [0], [0], [1], [0, 0, 1, 1], [], []>} : vector<8x128xbf16>, vector<128x128xbf16>, vector<8x128xf32> -> vector<8x128xf32>
    %c0_9 = arith.constant 0 : index
    %c0_10 = arith.constant 0 : index
    %11 = vector.load %arg5[%c0_9, %c0_10] : memref<1x128xf32, #tpu.memory_space<vmem>>, vector<1x128xf32>
    %12 = vector.broadcast %11 : vector<1x128xf32> to vector<8x128xf32>
    %13 = arith.addf %10, %12 : vector<8x128xf32>
    %cst_11 = arith.constant 0.000000e+00 : f32
    %14 = vector.broadcast %cst_11 : f32 to vector<8x128xf32>
    %15 = arith.maximumf %13, %14 : vector<8x128xf32>
    %16 = arith.truncf %15 : vector<8x128xf32> to vector<8x128xbf16>
    %c0_12 = arith.constant 0 : index
    %c0_13 = arith.constant 0 : index
    %17 = vector.load %arg6[%c0_12, %c0_13] : memref<128x128xbf16, #tpu.memory_space<vmem>>, vector<128x128xbf16>
    %cst_14 = arith.constant dense<0.000000e+00> : vector<8x128xf32>
    %18 = tpu.matmul %16, %17, %cst_14 {dimension_numbers = #tpu.dot_dimension_numbers<[1], [0], [0], [1], [0, 0, 1, 1], [], []>} : vector<8x128xbf16>, vector<128x128xbf16>, vector<8x128xf32> -> vector<8x128xf32>
    %c0_15 = arith.constant 0 : index
    %c0_16 = arith.constant 0 : index
    %19 = vector.load %arg7[%c0_15, %c0_16] : memref<1x128xf32, #tpu.memory_space<vmem>>, vector<1x128xf32>
    %20 = vector.broadcast %19 : vector<1x128xf32> to vector<8x128xf32>
    %21 = arith.addf %18, %20 : vector<8x128xf32>
    %cst_17 = arith.constant 0.000000e+00 : f32
    %22 = vector.broadcast %cst_17 : f32 to vector<8x128xf32>
    %23 = arith.maximumf %21, %22 : vector<8x128xf32>
    %24 = arith.truncf %23 : vector<8x128xf32> to vector<8x128xbf16>
    %c0_18 = arith.constant 0 : index
    %c0_19 = arith.constant 0 : index
    %25 = vector.load %arg8[%c0_18, %c0_19] : memref<128x128xbf16, #tpu.memory_space<vmem>>, vector<128x128xbf16>
    %cst_20 = arith.constant dense<0.000000e+00> : vector<8x128xf32>
    %26 = tpu.matmul %24, %25, %cst_20 {dimension_numbers = #tpu.dot_dimension_numbers<[1], [0], [0], [1], [0, 0, 1, 1], [], []>} : vector<8x128xbf16>, vector<128x128xbf16>, vector<8x128xf32> -> vector<8x128xf32>
    %c0_21 = arith.constant 0 : index
    %c0_22 = arith.constant 0 : index
    %27 = vector.load %arg9[%c0_21, %c0_22] : memref<1x128xf32, #tpu.memory_space<vmem>>, vector<1x128xf32>
    %28 = vector.broadcast %27 : vector<1x128xf32> to vector<8x128xf32>
    %29 = arith.addf %26, %28 : vector<8x128xf32>
    %cst_23 = arith.constant 0.000000e+00 : f32
    %30 = vector.broadcast %cst_23 : f32 to vector<8x128xf32>
    %31 = arith.maximumf %29, %30 : vector<8x128xf32>
    %32 = arith.truncf %31 : vector<8x128xf32> to vector<8x128xbf16>
    %c0_24 = arith.constant 0 : index
    %c0_25 = arith.constant 0 : index
    %33 = vector.load %arg10[%c0_24, %c0_25] : memref<128x8xbf16, #tpu.memory_space<vmem>>, vector<128x8xbf16>
    %cst_26 = arith.constant dense<0.000000e+00> : vector<8x8xf32>
    %34 = tpu.matmul %32, %33, %cst_26 {dimension_numbers = #tpu.dot_dimension_numbers<[1], [0], [0], [1], [0, 0, 1, 1], [], []>} : vector<8x128xbf16>, vector<128x8xbf16>, vector<8x8xf32> -> vector<8x8xf32>
    %c0_27 = arith.constant 0 : index
    %c0_28 = arith.constant 0 : index
    %35 = vector.load %arg11[%c0_27, %c0_28] : memref<1x8xf32, #tpu.memory_space<vmem>>, vector<1x8xf32>
    %36 = vector.broadcast %35 : vector<1x8xf32> to vector<8x8xf32>
    %37 = arith.addf %34, %36 : vector<8x8xf32>
    %c0_29 = arith.constant 0 : index
    %c0_30 = arith.constant 0 : index
    %38 = vector.load %arg12[%c0_29, %c0_30] : memref<8x8xf32, #tpu.memory_space<vmem>>, vector<8x8xf32>
    tpu.vector_store %arg12[%c0_29, %c0_30], %37 {strides = array<i32>} : memref<8x8xf32, #tpu.memory_space<vmem>>, vector<8x8xf32>,
    return
  }
  func.func @transform_0(%arg0: i32) -> (i32, i32) {
    %c0_i32 = arith.constant 0 : i32
    %c0_i32_0 = arith.constant 0 : i32
    return %arg0, %c0_i32 : i32, i32
  }
  func.func @transform_1(%arg0: i32) -> (i32, i32) {
    %c0_i32 = arith.constant 0 : i32
    %c0_i32_0 = arith.constant 0 : i32
    %c0_i32_1 = arith.constant 0 : i32
    return %c0_i32, %c0_i32_0 : i32, i32
  }
  func.func @transform_2(%arg0: i32) -> (i32, i32) {
    %c0_i32 = arith.constant 0 : i32
    %c0_i32_0 = arith.constant 0 : i32
    %c0_i32_1 = arith.constant 0 : i32
    return %c0_i32, %c0_i32_0 : i32, i32
  }
  func.func @transform_3(%arg0: i32) -> (i32, i32) {
    %c0_i32 = arith.constant 0 : i32
    %c0_i32_0 = arith.constant 0 : i32
    %c0_i32_1 = arith.constant 0 : i32
    return %c0_i32, %c0_i32_0 : i32, i32
  }
  func.func @transform_4(%arg0: i32) -> (i32, i32) {
    %c0_i32 = arith.constant 0 : i32
    %c0_i32_0 = arith.constant 0 : i32
    %c0_i32_1 = arith.constant 0 : i32
    return %c0_i32, %c0_i32_0 : i32, i32
  }
  func.func @transform_5(%arg0: i32) -> (i32, i32) {
    %c0_i32 = arith.constant 0 : i32
    %c0_i32_0 = arith.constant 0 : i32
    %c0_i32_1 = arith.constant 0 : i32
    return %c0_i32, %c0_i32_0 : i32, i32
  }
  func.func @transform_6(%arg0: i32) -> (i32, i32) {
    %c0_i32 = arith.constant 0 : i32
    %c0_i32_0 = arith.constant 0 : i32
    %c0_i32_1 = arith.constant 0 : i32
    return %c0_i32, %c0_i32_0 : i32, i32
  }
  func.func @transform_7(%arg0: i32) -> (i32, i32) {
    %c0_i32 = arith.constant 0 : i32
    %c0_i32_0 = arith.constant 0 : i32
    %c0_i32_1 = arith.constant 0 : i32
    return %c0_i32, %c0_i32_0 : i32, i32
  }
  func.func @transform_8(%arg0: i32) -> (i32, i32) {
    %c0_i32 = arith.constant 0 : i32
    %c0_i32_0 = arith.constant 0 : i32
    %c0_i32_1 = arith.constant 0 : i32
    return %c0_i32, %c0_i32_0 : i32, i32
  }
  func.func @transform_9(%arg0: i32) -> (i32, i32) {
    %c0_i32 = arith.constant 0 : i32
    %c0_i32_0 = arith.constant 0 : i32
    %c0_i32_1 = arith.constant 0 : i32
    return %c0_i32, %c0_i32_0 : i32, i32
  }
  func.func @transform_10(%arg0: i32) -> (i32, i32) {
    %c0_i32 = arith.constant 0 : i32
    %c0_i32_0 = arith.constant 0 : i32
    %c0_i32_1 = arith.constant 0 : i32
    return %c0_i32, %c0_i32_0 : i32, i32
  }
  func.func @transform_11(%arg0: i32) -> (i32, i32) {
    %c0_i32 = arith.constant 0 : i32
    %c0_i32_0 = arith.constant 0 : i32
    return %arg0, %c0_i32 : i32, i32
  }
}

</mosaic_0001>

<llo_original>
// kernel: tpu_custom_call.1
$region0: #{tpu_custom_call.1}
  #allocation0 [shape = 'u32[]', space=smem, size = 0x4, offset = 0x4, fixed_abs, tag = 'smem constant byte address 0x4 - core index']
  #allocation1 [shape = 'u32[144,128]{1,0:T(1,128)}', space=vmem, size = 0x12000, scoped, tag = 'internal scratch']
  %s0 = inlined_call_operand.vmem [shape: bf16[16,16], index: 0, kind: input, shape index: {}]
  %s1 = inlined_call_operand.hbm [shape: bf16[16,128], index: 1, kind: input, shape index: {}]
  %s2 = inlined_call_operand.vmem [shape: f32[1,128], index: 2, kind: input, shape index: {}]
  %s3 = inlined_call_operand.vmem [shape: bf16[128,128], index: 3, kind: input, shape index: {}]
  %s4 = inlined_call_operand.vmem [shape: f32[1,128], index: 4, kind: input, shape index: {}]
  %s5 = inlined_call_operand.hbm [shape: bf16[128,128], index: 5, kind: input, shape index: {}]
  %s6 = inlined_call_operand.vmem [shape: f32[1,128], index: 6, kind: input, shape index: {}]
  %s7 = inlined_call_operand.hbm [shape: bf16[128,128], index: 7, kind: input, shape index: {}]
  %s8 = inlined_call_operand.vmem [shape: f32[1,128], index: 8, kind: input, shape index: {}]
  %s9 = inlined_call_operand.vmem [shape: bf16[128,8], index: 9, kind: input, shape index: {}]
  %s10 = inlined_call_operand.vmem [shape: f32[1,8], index: 10, kind: input, shape index: {}]
  %s11 = inlined_call_operand.vmem [shape: f32[16,8], index: 11, kind: output, shape index: {}]
  %s12 = sld [smem:[#allocation0]]
  $region89: #{tpu_custom_call.1} parent=0
    _
  %s14 = ssub.s32 1, %s12
  %s15 = scalar_select 0, %s14, %s12
  $region1: #{tpu_custom_call.1} parent=0
    #allocation2 [shape = 'u8[4096]{0}', space=vmem, size = 0x1000, scoped, tag = 'input window, operand 1, single buffered']
    #allocation3 [shape = 's32[2]{0}', space=sflag, size = 0x8, scoped, tag = 'scoped memory for tpu_custom_call.1']
    #allocation4 [shape = 'u8[32768]{0}', space=vmem, size = 0x8000, scoped, tag = 'input window, operand 5, single buffered']
    #allocation5 [shape = 's32[1]{0}', space=sflag, size = 0x4, scoped, tag = 'scoped memory for tpu_custom_call.1']
    #allocation6 [shape = 'u8[32768]{0}', space=vmem, size = 0x8000, scoped, tag = 'input window, operand 7, single buffered']
    %16 = vsyncpa [#allocation3], 0
    %17 = vsyncpa [#allocation5], 0
    loop: start=0, step=1, limit=4
    $region2: #{tpu_custom_call.1} parent=1 // loop_pre_header
      _
    $region3: #{tpu_custom_call.1} parent=1 // loop_header
      %s19 = sphi 0, %s23
      %p20 = scmp.ge.s32.totalorder %s19, 4
      %s29 = sphi 0, %s31
      %s32 = sphi 0, %s29
      %s33 = sphi 0, %s32
      %s49 = sphi 0, %s33
      %s53 = sphi 0, %s53
      %s55 = sphi 0, %s53
      %s56 = sphi 0, %s55
      %s70 = sphi 0, %s56
      %s74 = sphi 0, %s74
      %s76 = sphi 0, %s74
      %s77 = sphi 0, %s76
      %s91 = sphi 0, %s77
      %s95 = sphi 0, %s95
      %s97 = sphi 0, %s95
      %s98 = sphi 0, %s97
      %s112 = sphi 0, %s98
      %s116 = sphi 0, %s116
      %s118 = sphi 0, %s116
      %s119 = sphi 0, %s118
      %s133 = sphi 0, %s119
      %s137 = sphi 0, %s137
      %s139 = sphi 0, %s137
      %s140 = sphi 0, %s139
      %s154 = sphi 0, %s140
      %s158 = sphi 0, %s158
      %s160 = sphi 0, %s158
      %s161 = sphi 0, %s160
      %s175 = sphi 0, %s161
      %s179 = sphi 0, %s179
      %s181 = sphi 0, %s179
      %s182 = sphi 0, %s181
      %s196 = sphi 0, %s182
      %s200 = sphi 0, %s200
      %s202 = sphi 0, %s200
      %s203 = sphi 0, %s202
      %s217 = sphi 0, %s203
      %s221 = sphi 0, %s221
      %s223 = sphi 0, %s221
      %s224 = sphi 0, %s223
      %s238 = sphi 0, %s224
      %s242 = sphi 0, %s242
      %s244 = sphi 0, %s242
      %s245 = sphi 0, %s244
      %s259 = sphi 0, %s245
      %s265 = sphi 0, %s267
      %s268 = sphi 0, %s265
      %s269 = sphi 0, %s268
      %s285 = sphi 0, %s269
    $region4: #{tpu_custom_call.1} parent=1 // loop_header_branch
      %22 = sbr.rel (%p20) target = $region8
    $region5: #{tpu_custom_call.1} parent=1 // loop_body
      %s24 = ssub.s32 %s19, 1
      %s25 = ssub.s32 %s19, 2
      %s26 = sadd.s32 %s19, 1
      %s27 = ssub.s32 %s19, %s26
      %p28 = scmp.eq.s32.totalorder %s27, 0
      %s30 = sadd.s32 %s29, 1
      %s31 = scalar_select %p28, %s29, %s30
      %p34 = pneg %p28
      %p35 = scmp.eq.s32.totalorder %s19, 1
      %p36 = por %p34, %p35
      %p37 = scmp.ne.s32.totalorder %s29, %s32
      %p38 = scmp.eq.s32.totalorder %s19, 0
      %p39 = por %p37, %p38
      %p40 = scmp.ne.s32.totalorder %s29, %s32
      %p41 = scmp.eq.s32.totalorder %s24, 1
      %p42 = por %p40, %p41
      %p43 = scmp.ne.s32.totalorder %s32, %s33
      %p44 = scmp.eq.s32.totalorder %s24, 0
      %p45 = por %p43, %p44
      %p46 = scmp.ne.s32.totalorder %s32, %s33
      %p47 = scmp.eq.s32.totalorder %s25, 1
      %p48 = por %p46, %p47
      %p50 = scmp.ne.s32.totalorder %s33, %s49
      %p51 = scmp.eq.s32.totalorder %s25, 0
      %p52 = por %p50, %p51
      %s54 = sadd.s32 %s53, 1
      %p57 = scmp.eq.s32.totalorder %s19, 1
      %p58 = scmp.ne.s32.totalorder %s53, %s55
      %p59 = scmp.eq.s32.totalorder %s19, 0
      %p60 = por %p58, %p59
      %p61 = scmp.ne.s32.totalorder %s53, %s55
      %p62 = scmp.eq.s32.totalorder %s24, 1
      %p63 = por %p61, %p62
      %p64 = scmp.ne.s32.totalorder %s55, %s56
      %p65 = scmp.eq.s32.totalorder %s24, 0
      %p66 = por %p64, %p65
      %p67 = scmp.ne.s32.totalorder %s55, %s56
      %p68 = scmp.eq.s32.totalorder %s25, 1
      %p69 = por %p67, %p68
      %p71 = scmp.ne.s32.totalorder %s56, %s70
      %p72 = scmp.eq.s32.totalorder %s25, 0
      %p73 = por %p71, %p72
      %s75 = sadd.s32 %s74, 1
      %p78 = scmp.eq.s32.totalorder %s19, 1
      %p79 = scmp.ne.s32.totalorder %s74, %s76
      %p80 = scmp.eq.s32.totalorder %s19, 0
      %p81 = por %p79, %p80
      %p82 = scmp.ne.s32.totalorder %s74, %s76
      %p83 = scmp.eq.s32.totalorder %s24, 1
      %p84 = por %p82, %p83
      %p85 = scmp.ne.s32.totalorder %s76, %s77
      %p86 = scmp.eq.s32.totalorder %s24, 0
      %p87 = por %p85, %p86
      %p88 = scmp.ne.s32.totalorder %s76, %s77
      %p89 = scmp.eq.s32.totalorder %s25, 1
      %p90 = por %p88, %p89
      %p92 = scmp.ne.s32.totalorder %s77, %s91
      %p93 = scmp.eq.s32.totalorder %s25, 0
      %p94 = por %p92, %p93
      %s96 = sadd.s32 %s95, 1
      %p99 = scmp.eq.s32.totalorder %s19, 1
      %p100 = scmp.ne.s32.totalorder %s95, %s97
      %p101 = scmp.eq.s32.totalorder %s19, 0
      %p102 = por %p100, %p101
      %p103 = scmp.ne.s32.totalorder %s95, %s97
      %p104 = scmp.eq.s32.totalorder %s24, 1
      %p105 = por %p103, %p104
      %p106 = scmp.ne.s32.totalorder %s97, %s98
      %p107 = scmp.eq.s32.totalorder %s24, 0
      %p108 = por %p106, %p107
      %p109 = scmp.ne.s32.totalorder %s97, %s98
      %p110 = scmp.eq.s32.totalorder %s25, 1
      %p111 = por %p109, %p110
      %p113 = scmp.ne.s32.totalorder %s98, %s112
      %p114 = scmp.eq.s32.totalorder %s25, 0
      %p115 = por %p113, %p114
      %s117 = sadd.s32 %s116, 1
      %p120 = scmp.eq.s32.totalorder %s19, 1
      %p121 = scmp.ne.s32.totalorder %s116, %s118
      %p122 = scmp.eq.s32.totalorder %s19, 0
      %p123 = por %p121, %p122
      %p124 = scmp.ne.s32.totalorder %s116, %s118
      %p125 = scmp.eq.s32.totalorder %s24, 1
      %p126 = por %p124, %p125
      %p127 = scmp.ne.s32.totalorder %s118, %s119
      %p128 = scmp.eq.s32.totalorder %s24, 0
      %p129 = por %p127, %p128
      %p130 = scmp.ne.s32.totalorder %s118, %s119
      %p131 = scmp.eq.s32.totalorder %s25, 1
      %p132 = por %p130, %p131
      %p134 = scmp.ne.s32.totalorder %s119, %s133
      %p135 = scmp.eq.s32.totalorder %s25, 0
      %p136 = por %p134, %p135
      %s138 = sadd.s32 %s137, 1
      %p141 = scmp.eq.s32.totalorder %s19, 1
      %p142 = scmp.ne.s32.totalorder %s137, %s139
      %p143 = scmp.eq.s32.totalorder %s19, 0
      %p144 = por %p142, %p143
      %p145 = scmp.ne.s32.totalorder %s137, %s139
      %p146 = scmp.eq.s32.totalorder %s24, 1
      %p147 = por %p145, %p146
      %p148 = scmp.ne.s32.totalorder %s139, %s140
      %p149 = scmp.eq.s32.totalorder %s24, 0
      %p150 = por %p148, %p149
      %p151 = scmp.ne.s32.totalorder %s139, %s140
      %p152 = scmp.eq.s32.totalorder %s25, 1
      %p153 = por %p151, %p152
      %p155 = scmp.ne.s32.totalorder %s140, %s154
      %p156 = scmp.eq.s32.totalorder %s25, 0
      %p157 = por %p155, %p156
      %s159 = sadd.s32 %s158, 1
      %p162 = scmp.eq.s32.totalorder %s19, 1
      %p163 = scmp.ne.s32.totalorder %s158, %s160
      %p164 = scmp.eq.s32.totalorder %s19, 0
      %p165 = por %p163, %p164
      %p166 = scmp.ne.s32.totalorder %s158, %s160
      %p167 = scmp.eq.s32.totalorder %s24, 1
      %p168 = por %p166, %p167
      %p169 = scmp.ne.s32.totalorder %s160, %s161
      %p170 = scmp.eq.s32.totalorder %s24, 0
      %p171 = por %p169, %p170
      %p172 = scmp.ne.s32.totalorder %s160, %s161
      %p173 = scmp.eq.s32.totalorder %s25, 1
      %p174 = por %p172, %p173
      %p176 = scmp.ne.s32.totalorder %s161, %s175
      %p177 = scmp.eq.s32.totalorder %s25, 0
      %p178 = por %p176, %p177
      %s180 = sadd.s32 %s179, 1
      %p183 = scmp.eq.s32.totalorder %s19, 1
      %p184 = scmp.ne.s32.totalorder %s179, %s181
      %p185 = scmp.eq.s32.totalorder %s19, 0
      %p186 = por %p184, %p185
      %p187 = scmp.ne.s32.totalorder %s179, %s181
      %p188 = scmp.eq.s32.totalorder %s24, 1
      %p189 = por %p187, %p188
      %p190 = scmp.ne.s32.totalorder %s181, %s182
      %p191 = scmp.eq.s32.totalorder %s24, 0
      %p192 = por %p190, %p191
      %p193 = scmp.ne.s32.totalorder %s181, %s182
      %p194 = scmp.eq.s32.totalorder %s25, 1
      %p195 = por %p193, %p194
      %p197 = scmp.ne.s32.totalorder %s182, %s196
      %p198 = scmp.eq.s32.totalorder %s25, 0
      %p199 = por %p197, %p198
      %s201 = sadd.s32 %s200, 1
      %p204 = scmp.eq.s32.totalorder %s19, 1
      %p205 = scmp.ne.s32.totalorder %s200, %s202
      %p206 = scmp.eq.s32.totalorder %s19, 0
      %p207 = por %p205, %p206
      %p208 = scmp.ne.s32.totalorder %s200, %s202
      %p209 = scmp.eq.s32.totalorder %s24, 1
      %p210 = por %p208, %p209
      %p211 = scmp.ne.s32.totalorder %s202, %s203
      %p212 = scmp.eq.s32.totalorder %s24, 0
      %p213 = por %p211, %p212
      %p214 = scmp.ne.s32.totalorder %s202, %s203
      %p215 = scmp.eq.s32.totalorder %s25, 1
      %p216 = por %p214, %p215
      %p218 = scmp.ne.s32.totalorder %s203, %s217
      %p219 = scmp.eq.s32.totalorder %s25, 0
      %p220 = por %p218, %p219
      %s222 = sadd.s32 %s221, 1
      %p225 = scmp.eq.s32.totalorder %s19, 1
      %p226 = scmp.ne.s32.totalorder %s221, %s223
      %p227 = scmp.eq.s32.totalorder %s19, 0
      %p228 = por %p226, %p227
      %p229 = scmp.ne.s32.totalorder %s221, %s223
      %p230 = scmp.eq.s32.totalorder %s24, 1
      %p231 = por %p229, %p230
      %p232 = scmp.ne.s32.totalorder %s223, %s224
      %p233 = scmp.eq.s32.totalorder %s24, 0
      %p234 = por %p232, %p233
      %p235 = scmp.ne.s32.totalorder %s223, %s224
      %p236 = scmp.eq.s32.totalorder %s25, 1
      %p237 = por %p235, %p236
      %p239 = scmp.ne.s32.totalorder %s224, %s238
      %p240 = scmp.eq.s32.totalorder %s25, 0
      %p241 = por %p239, %p240
      %s243 = sadd.s32 %s242, 1
      %p246 = scmp.eq.s32.totalorder %s19, 1
      %p247 = scmp.ne.s32.totalorder %s242, %s244
      %p248 = scmp.eq.s32.totalorder %s19, 0
      %p249 = por %p247, %p248
      %p250 = scmp.ne.s32.totalorder %s242, %s244
      %p251 = scmp.eq.s32.totalorder %s24, 1
      %p252 = por %p250, %p251
      %p253 = scmp.ne.s32.totalorder %s244, %s245
      %p254 = scmp.eq.s32.totalorder %s24, 0
      %p255 = por %p253, %p254
      %p256 = scmp.ne.s32.totalorder %s244, %s245
      %p257 = scmp.eq.s32.totalorder %s25, 1
      %p258 = por %p256, %p257
      %p260 = scmp.ne.s32.totalorder %s245, %s259
      %p261 = scmp.eq.s32.totalorder %s25, 0
      %p262 = por %p260, %p261
      %s263 = ssub.s32 %s19, %s26
      %p264 = scmp.eq.s32.totalorder %s263, 0
      %s266 = sadd.s32 %s265, 1
      %s267 = scalar_select %p264, %s265, %s266
      %p270 = pneg %p264
      %p271 = scmp.eq.s32.totalorder %s19, 1
      %p272 = por %p270, %p271
      %p273 = scmp.ne.s32.totalorder %s265, %s268
      %p274 = scmp.eq.s32.totalorder %s19, 0
      %p275 = por %p273, %p274
      %p276 = scmp.ne.s32.totalorder %s265, %s268
      %p277 = scmp.eq.s32.totalorder %s24, 1
      %p278 = por %p276, %p277
      %p279 = scmp.ne.s32.totalorder %s268, %s269
      %p280 = scmp.eq.s32.totalorder %s24, 0
      %p281 = por %p279, %p280
      %p282 = scmp.ne.s32.totalorder %s268, %s269
      %p283 = scmp.eq.s32.totalorder %s25, 1
      %p284 = por %p282, %p283
      %p286 = scmp.ne.s32.totalorder %s269, %s285
      %p287 = scmp.eq.s32.totalorder %s25, 0
      %p288 = por %p286, %p287
      %p289 = scmp.le.s32.totalorder 1, %s19
      %p290 = scmp.lt.s32.totalorder %s19, 3
      %p291 = pnand %p289, %p290
      %p292 = pneg %p291
      // Predicated region
      $region9: #{tpu_custom_call.1} parent=5 // pred_check
        _
      $region10: #{tpu_custom_call.1} parent=5 // pred_check_branch
        %294 = sbr.rel (%p291) target = $region12
      $region11: #{tpu_custom_call.1} parent=5 // pred_region
        %s295 = ssub.s32 %s19, 1
        // Predicated region
        $region13: #{tpu_custom_call.1} parent=11 // pred_check
          %p296 = pneg %p66
        $region14: #{tpu_custom_call.1} parent=11 // pred_check_branch
          %298 = sbr.rel (%p296) target = $region16
        $region15: #{tpu_custom_call.1} parent=11 // pred_region
          %s300 = ssub.s32 128, 128
          %301 = vsyncadd [#allocation3], %s300
          %s302 = sshll.u32 [#allocation2], 4
          %s303 = int_to_ptr.vmem [resolvable:$true] %s302
          %308 = dma.hbm_to_vmem [thread:$0]  %s1, 128, %s303, [#allocation3], 64, 64, 4
        $region16: #{tpu_custom_call.1} parent=11 // pred_fallthru
          _
        // Predicated region
        $region17: #{tpu_custom_call.1} parent=11 // pred_check
          %p309 = pneg %p87
        $region18: #{tpu_custom_call.1} parent=11 // pred_check_branch
          %311 = sbr.rel (%p309) target = $region20
        $region19: #{tpu_custom_call.1} parent=11 // pred_region
          _
        $region20: #{tpu_custom_call.1} parent=11 // pred_fallthru
          _
        // Predicated region
        $region21: #{tpu_custom_call.1} parent=11 // pred_check
          %p312 = pneg %p108
        $region22: #{tpu_custom_call.1} parent=11 // pred_check_branch
          %314 = sbr.rel (%p312) target = $region24
        $region23: #{tpu_custom_call.1} parent=11 // pred_region
          _
        $region24: #{tpu_custom_call.1} parent=11 // pred_fallthru
          _
        // Predicated region
        $region25: #{tpu_custom_call.1} parent=11 // pred_check
          %p315 = pneg %p129
        $region26: #{tpu_custom_call.1} parent=11 // pred_check_branch
          %317 = sbr.rel (%p315) target = $region28
        $region27: #{tpu_custom_call.1} parent=11 // pred_region
          _
        $region28: #{tpu_custom_call.1} parent=11 // pred_fallthru
          _
        // Predicated region
        $region29: #{tpu_custom_call.1} parent=11 // pred_check
          %p318 = pneg %p150
        $region30: #{tpu_custom_call.1} parent=11 // pred_check_branch
          %320 = sbr.rel (%p318) target = $region32
        $region31: #{tpu_custom_call.1} parent=11 // pred_region
          %s322 = ssub.s32 1024, 1024
          %323 = vsyncadd [#allocation5], %s322
          %s324 = sshll.u32 [#allocation4], 4
          %s325 = int_to_ptr.vmem [resolvable:$true] %s324
          %330 = dma.hbm_to_vmem [thread:$0]  %s5, 1024, %s325, [#allocation5], 64, 64, 4
        $region32: #{tpu_custom_call.1} parent=11 // pred_fallthru
          _
        // Predicated region
        $region33: #{tpu_custom_call.1} parent=11 // pred_check
          %p331 = pneg %p171
        $region34: #{tpu_custom_call.1} parent=11 // pred_check_branch
          %333 = sbr.rel (%p331) target = $region36
        $region35: #{tpu_custom_call.1} parent=11 // pred_region
          _
        $region36: #{tpu_custom_call.1} parent=11 // pred_fallthru
          _
        // Predicated region
        $region37: #{tpu_custom_call.1} parent=11 // pred_check
          %p334 = pneg %p192
        $region38: #{tpu_custom_call.1} parent=11 // pred_check_branch
          %336 = sbr.rel (%p334) target = $region40
        $region39: #{tpu_custom_call.1} parent=11 // pred_region
          %s338 = ssub.s32 1024, 1024
          %339 = vsyncadd [#allocation5], %s338
          %s340 = sshll.u32 [#allocation6], 4
          %s341 = int_to_ptr.vmem [resolvable:$true] %s340
          %346 = dma.hbm_to_vmem [thread:$0]  %s7, 1024, %s341, [#allocation5], 64, 64, 4
        $region40: #{tpu_custom_call.1} parent=11 // pred_fallthru
          _
        // Predicated region
        $region41: #{tpu_custom_call.1} parent=11 // pred_check
          %p347 = pneg %p213
        $region42: #{tpu_custom_call.1} parent=11 // pred_check_branch
          %349 = sbr.rel (%p347) target = $region44
        $region43: #{tpu_custom_call.1} parent=11 // pred_region
          _
        $region44: #{tpu_custom_call.1} parent=11 // pred_fallthru
          _
        // Predicated region
        $region45: #{tpu_custom_call.1} parent=11 // pred_check
          %p350 = pneg %p234
        $region46: #{tpu_custom_call.1} parent=11 // pred_check_branch
          %352 = sbr.rel (%p350) target = $region48
        $region47: #{tpu_custom_call.1} parent=11 // pred_region
          _
        $region48: #{tpu_custom_call.1} parent=11 // pred_fallthru
          _
        // Predicated region
        $region49: #{tpu_custom_call.1} parent=11 // pred_check
          %p353 = pneg %p255
        $region50: #{tpu_custom_call.1} parent=11 // pred_check_branch
          %355 = sbr.rel (%p353) target = $region52
        $region51: #{tpu_custom_call.1} parent=11 // pred_region
          _
        $region52: #{tpu_custom_call.1} parent=11 // pred_fallthru
          _
      $region12: #{tpu_custom_call.1} parent=5 // pred_fallthru
        _
      %p356 = scmp.lt.s32.totalorder %s19, 2
      // Predicated region
      $region53: #{tpu_custom_call.1} parent=5 // pred_check
        %p357 = pneg %p356
      $region54: #{tpu_custom_call.1} parent=5 // pred_check_branch
        %359 = sbr.rel (%p357) target = $region56
      $region55: #{tpu_custom_call.1} parent=5 // pred_region
        // Predicated region
        $region57: #{tpu_custom_call.1} parent=55 // pred_check
          %p360 = pneg %p39
        $region58: #{tpu_custom_call.1} parent=55 // pred_check_branch
          %362 = sbr.rel (%p360) target = $region60
        $region59: #{tpu_custom_call.1} parent=55 // pred_region
          %p363 = scmp.lt.s32.totalorder %s19, 1
          %s364 = scalar_select %p363, %s19, 1
          %s365 = smul.addr %s364, 4
          %s366 = scalar_lea.vmem %s0, %s365
        $region60: #{tpu_custom_call.1} parent=55 // pred_fallthru
          _
      $region56: #{tpu_custom_call.1} parent=5 // pred_fallthru
        _
      %p367 = scmp.le.s32.totalorder 1, %s19
      %p368 = scmp.lt.s32.totalorder %s19, 3
      %p369 = pnand %p367, %p368
      %p370 = pneg %p369
      // Predicated region
      $region61: #{tpu_custom_call.1} parent=5 // pred_check
        _
      $region62: #{tpu_custom_call.1} parent=5 // pred_check_branch
        %372 = sbr.rel (%p369) target = $region64
      $region63: #{tpu_custom_call.1} parent=5 // pred_region
        %s373 = ssub.s32 %s19, 1
        // Predicated region
        $region65: #{tpu_custom_call.1} parent=63 // pred_check
          %p374 = pneg %p66
        $region66: #{tpu_custom_call.1} parent=63 // pred_check_branch
          %376 = sbr.rel (%p374) target = $region68
        $region67: #{tpu_custom_call.1} parent=63 // pred_region
          %377 = dma.done [#allocation3], 128
        $region68: #{tpu_custom_call.1} parent=63 // pred_fallthru
          _
        // Predicated region
        $region69: #{tpu_custom_call.1} parent=63 // pred_check
          %p378 = pneg %p150
        $region70: #{tpu_custom_call.1} parent=63 // pred_check_branch
          %380 = sbr.rel (%p378) target = $region72
        $region71: #{tpu_custom_call.1} parent=63 // pred_region
          %381 = dma.done [#allocation5], 1024
        $region72: #{tpu_custom_call.1} parent=63 // pred_fallthru
          _
        // Predicated region
        $region73: #{tpu_custom_call.1} parent=63 // pred_check
          %p382 = pneg %p192
        $region74: #{tpu_custom_call.1} parent=63 // pred_check_branch
          %384 = sbr.rel (%p382) target = $region76
        $region75: #{tpu_custom_call.1} parent=63 // pred_region
          %385 = dma.done [#allocation5], 1024
        $region76: #{tpu_custom_call.1} parent=63 // pred_fallthru
          _
        %p386 = scmp.lt.s32.totalorder %s24, 1
        %s387 = scalar_select %p386, %s24, 1
        %s388 = smul.addr %s387, 4
        %s389 = scalar_lea.vmem %s0, %s388
        %p390 = pneg %p45
        %p391 = pneg %p42
        %p392 = pneg %p66
        %p393 = pneg %p63
        %p394 = pneg %p87
        %p395 = pneg %p84
        %p396 = pneg %p108
        %p397 = pneg %p105
        %p398 = pneg %p129
        %p399 = pneg %p126
        %p400 = pneg %p150
        %p401 = pneg %p147
        %p402 = pneg %p171
        %p403 = pneg %p168
        %p404 = pneg %p192
        %p405 = pneg %p189
        %p406 = pneg %p213
        %p407 = pneg %p210
        %p408 = pneg %p234
        %p409 = pneg %p231
        %p410 = pneg %p255
        %p411 = pneg %p252
        %p412 = pneg %p281
        %p413 = pneg %p278
        %p414 = scmp.lt.s32.totalorder %s24, 1
        %s415 = scalar_select %p414, %s24, 1
        %s416 = smul.addr %s415, 8
        %s417 = scalar_lea.vmem %s11, %s416
        %p418 = scmp.lt.s32.totalorder %s24, 1
        %s419 = scalar_select %p418, %s24, 1
        %s420 = smul.addr %s419, 4
        %s421 = scalar_lea.vmem %s0, %s420
        %p422 = scmp.lt.s32.totalorder %s24, 1
        %s423 = scalar_select %p422, %s24, 1
        %s424 = smul.addr %s423, 8
        %s425 = scalar_lea.vmem %s11, %s424
        %v427 = vld [vmem:[%s421] sm:$0xf]
        %v428 = vld [vmem:[#allocation2] sm:$0xf]
        %v429 = vld [vmem:[#allocation2 + $0x4] sm:$0xf]
        %v430 = vld [vmem:[%s2] sm:$0x1]
        %v432 = vlaneseq
        %v433 = vshrl.u32 %v432, 7
        %v434 = vsub.s32 0, %v433
        %v435 = vrot.slane %v430, %v434
        %v439 = vunpack.c.l.b16 %v428
        %v440 = vunpack.c.l.b16 %v429
        %v441 = vpack.c.b16 %v440, %v439
        %vm443 = vcmask 130048
        %v445 = vsel %vm443, %v427, 0
        %447 = vmatprep.subr.bf16.mxu0 0
        %448 = vmatpush1.bf16.msra.mxu0 %v441
        %449 = vmatprep.subr.bf16.mxu0 0
        %450 = vmatpush1.bf16.msra.mxu0 0
        %451 = vmatprep.subr.bf16.mxu0 0
        %452 = vmatpush1.bf16.msra.mxu0 0
        %453 = vmatprep.subr.bf16.mxu0 0
        %454 = vmatpush1.bf16.msra.mxu0 0
        %455 = vmatprep.subr.bf16.mxu0 0
        %456 = vmatpush1.bf16.msra.mxu0 0
        %457 = vmatprep.subr.bf16.mxu0 0
        %458 = vmatpush1.bf16.msra.mxu0 0
        %459 = vmatprep.subr.bf16.mxu0 0
        %460 = vmatpush1.bf16.msra.mxu0 0
        %461 = vmatprep.subr.bf16.mxu0 0
        %462 = vmatpush1.bf16.msra.mxu0 0
        %463 = vmatprep.subr.bf16.mxu0 0
        %464 = vmatpush1.bf16.msra.mxu0 0
        %465 = vmatprep.subr.bf16.mxu0 0
        %466 = vmatpush1.bf16.msra.mxu0 0
        %467 = vmatprep.subr.bf16.mxu0 0
        %468 = vmatpush1.bf16.msra.mxu0 0
        %469 = vmatprep.subr.bf16.mxu0 0
        %470 = vmatpush1.bf16.msra.mxu0 0
        %471 = vmatprep.subr.bf16.mxu0 0
        %472 = vmatpush1.bf16.msra.mxu0 0
        %473 = vmatprep.subr.bf16.mxu0 0
        %474 = vmatpush1.bf16.msra.mxu0 0
        %475 = vmatprep.subr.bf16.mxu0 0
        %476 = vmatpush1.bf16.msra.mxu0 0
        %477 = vmatprep.subr.bf16.mxu0 0
        %478 = vmatpush1.bf16.msra.mxu0 0
        %479 = vmatprep.mubr.bf16.mxu0 0
        %480 = vmatmul.mubr.bf16.gmra.mrb[0].mxu0 %v445
        %v481 = vpop.f32.mrb[0].mxu0
        %v482 = vadd.f32 %v435, %v481
        %v483 = vpop.f32.mrb[0].mxu0
        %v484 = vpop.f32.mrb[0].mxu0
        %v485 = vpop.f32.mrb[0].mxu0
        %486 = vdwg.mxu0
        %v487 = vmax.f32 %v482, 0.0
        %v488 = vpack.c.bf16 %v487, %v487
        %v489 = vld [vmem:[%s3] sm:$0xf]
        %v490 = vld [vmem:[%s3 + $0x4] sm:$0xf]
        %v491 = vld [vmem:[%s3 + $0x8] sm:$0xf]
        %v492 = vld [vmem:[%s3 + $0xc] sm:$0xf]
        %v493 = vld [vmem:[%s3 + $0x10] sm:$0xf]
        %v494 = vld [vmem:[%s3 + $0x14] sm:$0xf]
        %v495 = vld [vmem:[%s3 + $0x18] sm:$0xf]
        %v496 = vld [vmem:[%s3 + $0x1c] sm:$0xf]
        %v497 = vld [vmem:[%s3 + $0x20] sm:$0xf]
        %v498 = vld [vmem:[%s3 + $0x24] sm:$0xf]
        %v499 = vld [vmem:[%s3 + $0x28] sm:$0xf]
        %v500 = vld [vmem:[%s3 + $0x2c] sm:$0xf]
        %v501 = vld [vmem:[%s3 + $0x30] sm:$0xf]
        %v502 = vld [vmem:[%s3 + $0x34] sm:$0xf]
        %v503 = vld [vmem:[%s3 + $0x38] sm:$0xf]
        %v504 = vld [vmem:[%s3 + $0x3c] sm:$0xf]
        %v505 = vld [vmem:[%s4] sm:$0x1]
        %v507 = vlaneseq
        %v508 = vshrl.u32 %v507, 7
        %v509 = vsub.s32 0, %v508
        %v510 = vrot.slane %v505, %v509
        %v528 = vunpack.c.l.b16 %v489
        %v529 = vunpack.c.l.b16 %v490
        %v530 = vunpack.c.l.b16 %v491
        %v531 = vunpack.c.l.b16 %v492
        %v532 = vunpack.c.l.b16 %v493
        %v533 = vunpack.c.l.b16 %v494
        %v534 = vunpack.c.l.b16 %v495
        %v535 = vunpack.c.l.b16 %v496
        %v536 = vunpack.c.l.b16 %v497
        %v537 = vunpack.c.l.b16 %v498
        %v538 = vunpack.c.l.b16 %v499
        %v539 = vunpack.c.l.b16 %v500
        %v540 = vunpack.c.l.b16 %v501
        %v541 = vunpack.c.l.b16 %v502
        %v542 = vunpack.c.l.b16 %v503
        %v543 = vunpack.c.l.b16 %v504
        %v544 = vpack.c.b16 %v529, %v528
        %v545 = vpack.c.b16 %v531, %v530
        %v546 = vpack.c.b16 %v533, %v532
        %v547 = vpack.c.b16 %v535, %v534
        %v548 = vpack.c.b16 %v537, %v536
        %v549 = vpack.c.b16 %v539, %v538
        %v550 = vpack.c.b16 %v541, %v540
        %v551 = vpack.c.b16 %v543, %v542
        %560 = vmatprep.subr.bf16.mxu0 0
        %561 = vmatpush1.bf16.msra.mxu0 %v544
        %562 = vmatprep.subr.bf16.mxu0 0
        %563 = vmatpush1.bf16.msra.mxu0 %v545
        %564 = vmatprep.subr.bf16.mxu0 0
        %565 = vmatpush1.bf16.msra.mxu0 %v546
        %566 = vmatprep.subr.bf16.mxu0 0
        %567 = vmatpush1.bf16.msra.mxu0 %v547
        %568 = vmatprep.subr.bf16.mxu0 0
        %569 = vmatpush1.bf16.msra.mxu0 %v548
        %570 = vmatprep.subr.bf16.mxu0 0
        %571 = vmatpush1.bf16.msra.mxu0 %v549
        %572 = vmatprep.subr.bf16.mxu0 0
        %573 = vmatpush1.bf16.msra.mxu0 %v550
        %574 = vmatprep.subr.bf16.mxu0 0
        %575 = vmatpush1.bf16.msra.mxu0 %v551
        %576 = vmatprep.subr.bf16.mxu0 0
        %577 = vmatpush1.bf16.msra.mxu0 0
        %578 = vmatprep.subr.bf16.mxu0 0
        %579 = vmatpush1.bf16.msra.mxu0 0
        %580 = vmatprep.subr.bf16.mxu0 0
        %581 = vmatpush1.bf16.msra.mxu0 0
        %582 = vmatprep.subr.bf16.mxu0 0
        %583 = vmatpush1.bf16.msra.mxu0 0
        %584 = vmatprep.subr.bf16.mxu0 0
        %585 = vmatpush1.bf16.msra.mxu0 0
        %586 = vmatprep.subr.bf16.mxu0 0
        %587 = vmatpush1.bf16.msra.mxu0 0
        %588 = vmatprep.subr.bf16.mxu0 0
        %589 = vmatpush1.bf16.msra.mxu0 0
        %590 = vmatprep.subr.bf16.mxu0 0
        %591 = vmatpush1.bf16.msra.mxu0 0
        %592 = vmatprep.mubr.bf16.mxu0 0
        %593 = vmatmul.mubr.bf16.gmra.mrb[0].mxu0 %v488
        %v594 = vpop.f32.mrb[0].mxu0
        %v595 = vadd.f32 %v510, %v594
        %v596 = vpop.f32.mrb[0].mxu0
        %v597 = vpop.f32.mrb[0].mxu0
        %v598 = vpop.f32.mrb[0].mxu0
        %599 = vdwg.mxu0
        %v600 = vmax.f32 %v595, 0.0
        %v601 = vpack.c.bf16 %v600, %v600
        %v602 = vld [vmem:[#allocation4] sm:$0xf]
        %v603 = vld [vmem:[#allocation4 + $0x4] sm:$0xf]
        %v604 = vld [vmem:[#allocation4 + $0x8] sm:$0xf]
        %v605 = vld [vmem:[#allocation4 + $0xc] sm:$0xf]
        %v606 = vld [vmem:[#allocation4 + $0x10] sm:$0xf]
        %v607 = vld [vmem:[#allocation4 + $0x14] sm:$0xf]
        %v608 = vld [vmem:[#allocation4 + $0x18] sm:$0xf]
        %v609 = vld [vmem:[#allocation4 + $0x1c] sm:$0xf]
        %v610 = vld [vmem:[#allocation4 + $0x20] sm:$0xf]
        %v611 = vld [vmem:[#allocation4 + $0x24] sm:$0xf]
        %v612 = vld [vmem:[#allocation4 + $0x28] sm:$0xf]
        %v613 = vld [vmem:[#allocation4 + $0x2c] sm:$0xf]
        %v614 = vld [vmem:[#allocation4 + $0x30] sm:$0xf]
        %v615 = vld [vmem:[#allocation4 + $0x34] sm:$0xf]
        %v616 = vld [vmem:[#allocation4 + $0x38] sm:$0xf]
        %v617 = vld [vmem:[#allocation4 + $0x3c] sm:$0xf]
        %v618 = vld [vmem:[%s6] sm:$0x1]
        %v620 = vlaneseq
        %v621 = vshrl.u32 %v620, 7
        %v622 = vsub.s32 0, %v621
        %v623 = vrot.slane %v618, %v622
        %v641 = vunpack.c.l.b16 %v602
        %v642 = vunpack.c.l.b16 %v603
        %v643 = vunpack.c.l.b16 %v604
        %v644 = vunpack.c.l.b16 %v605
        %v645 = vunpack.c.l.b16 %v606
        %v646 = vunpack.c.l.b16 %v607
        %v647 = vunpack.c.l.b16 %v608
        %v648 = vunpack.c.l.b16 %v609
        %v649 = vunpack.c.l.b16 %v610
        %v650 = vunpack.c.l.b16 %v611
        %v651 = vunpack.c.l.b16 %v612
        %v652 = vunpack.c.l.b16 %v613
        %v653 = vunpack.c.l.b16 %v614
        %v654 = vunpack.c.l.b16 %v615
        %v655 = vunpack.c.l.b16 %v616
        %v656 = vunpack.c.l.b16 %v617
        %v657 = vpack.c.b16 %v642, %v641
        %v658 = vpack.c.b16 %v644, %v643
        %v659 = vpack.c.b16 %v646, %v645
        %v660 = vpack.c.b16 %v648, %v647
        %v661 = vpack.c.b16 %v650, %v649
        %v662 = vpack.c.b16 %v652, %v651
        %v663 = vpack.c.b16 %v654, %v653
        %v664 = vpack.c.b16 %v656, %v655
        %673 = vmatprep.subr.bf16.mxu0 0
        %674 = vmatpush1.bf16.msra.mxu0 %v657
        %675 = vmatprep.subr.bf16.mxu0 0
        %676 = vmatpush1.bf16.msra.mxu0 %v658
        %677 = vmatprep.subr.bf16.mxu0 0
        %678 = vmatpush1.bf16.msra.mxu0 %v659
        %679 = vmatprep.subr.bf16.mxu0 0
        %680 = vmatpush1.bf16.msra.mxu0 %v660
        %681 = vmatprep.subr.bf16.mxu0 0
        %682 = vmatpush1.bf16.msra.mxu0 %v661
        %683 = vmatprep.subr.bf16.mxu0 0
        %684 = vmatpush1.bf16.msra.mxu0 %v662
        %685 = vmatprep.subr.bf16.mxu0 0
        %686 = vmatpush1.bf16.msra.mxu0 %v663
        %687 = vmatprep.subr.bf16.mxu0 0
        %688 = vmatpush1.bf16.msra.mxu0 %v664
        %689 = vmatprep.subr.bf16.mxu0 0
        %690 = vmatpush1.bf16.msra.mxu0 0
        %691 = vmatprep.subr.bf16.mxu0 0
        %692 = vmatpush1.bf16.msra.mxu0 0
        %693 = vmatprep.subr.bf16.mxu0 0
        %694 = vmatpush1.bf16.msra.mxu0 0
        %695 = vmatprep.subr.bf16.mxu0 0
        %696 = vmatpush1.bf16.msra.mxu0 0
        %697 = vmatprep.subr.bf16.mxu0 0
        %698 = vmatpush1.bf16.msra.mxu0 0
        %699 = vmatprep.subr.bf16.mxu0 0
        %700 = vmatpush1.bf16.msra.mxu0 0
        %701 = vmatprep.subr.bf16.mxu0 0
        %702 = vmatpush1.bf16.msra.mxu0 0
        %703 = vmatprep.subr.bf16.mxu0 0
        %704 = vmatpush1.bf16.msra.mxu0 0
        %705 = vmatprep.mubr.bf16.mxu0 0
        %706 = vmatmul.mubr.bf16.gmra.mrb[0].mxu0 %v601
        %v707 = vpop.f32.mrb[0].mxu0
        %v708 = vadd.f32 %v623, %v707
        %v709 = vpop.f32.mrb[0].mxu0
        %v710 = vpop.f32.mrb[0].mxu0
        %v711 = vpop.f32.mrb[0].mxu0
        %712 = vdwg.mxu0
        %v713 = vmax.f32 %v708, 0.0
        %v714 = vpack.c.bf16 %v713, %v713
        %v715 = vld [vmem:[#allocation6] sm:$0xf]
        %v716 = vld [vmem:[#allocation6 + $0x4] sm:$0xf]
        %v717 = vld [vmem:[#allocation6 + $0x8] sm:$0xf]
        %v718 = vld [vmem:[#allocation6 + $0xc] sm:$0xf]
        %v719 = vld [vmem:[#allocation6 + $0x10] sm:$0xf]
        %v720 = vld [vmem:[#allocation6 + $0x14] sm:$0xf]
        %v721 = vld [vmem:[#allocation6 + $0x18] sm:$0xf]
        %v722 = vld [vmem:[#allocation6 + $0x1c] sm:$0xf]
        %v723 = vld [vmem:[#allocation6 + $0x20] sm:$0xf]
        %v724 = vld [vmem:[#allocation6 + $0x24] sm:$0xf]
        %v725 = vld [vmem:[#allocation6 + $0x28] sm:$0xf]
        %v726 = vld [vmem:[#allocation6 + $0x2c] sm:$0xf]
        %v727 = vld [vmem:[#allocation6 + $0x30] sm:$0xf]
        %v728 = vld [vmem:[#allocation6 + $0x34] sm:$0xf]
        %v729 = vld [vmem:[#allocation6 + $0x38] sm:$0xf]
        %v730 = vld [vmem:[#allocation6 + $0x3c] sm:$0xf]
        %v731 = vld [vmem:[%s8] sm:$0x1]
        %v733 = vlaneseq
        %v734 = vshrl.u32 %v733, 7
        %v735 = vsub.s32 0, %v734
        %v736 = vrot.slane %v731, %v735
        %v754 = vunpack.c.l.b16 %v715
        %v755 = vunpack.c.l.b16 %v716
        %v756 = vunpack.c.l.b16 %v717
        %v757 = vunpack.c.l.b16 %v718
        %v758 = vunpack.c.l.b16 %v719
        %v759 = vunpack.c.l.b16 %v720
        %v760 = vunpack.c.l.b16 %v721
        %v761 = vunpack.c.l.b16 %v722
        %v762 = vunpack.c.l.b16 %v723
        %v763 = vunpack.c.l.b16 %v724
        %v764 = vunpack.c.l.b16 %v725
        %v765 = vunpack.c.l.b16 %v726
        %v766 = vunpack.c.l.b16 %v727
        %v767 = vunpack.c.l.b16 %v728
        %v768 = vunpack.c.l.b16 %v729
        %v769 = vunpack.c.l.b16 %v730
        %v770 = vpack.c.b16 %v755, %v754
        %v771 = vpack.c.b16 %v757, %v756
        %v772 = vpack.c.b16 %v759, %v758
        %v773 = vpack.c.b16 %v761, %v760
        %v774 = vpack.c.b16 %v763, %v762
        %v775 = vpack.c.b16 %v765, %v764
        %v776 = vpack.c.b16 %v767, %v766
        %v777 = vpack.c.b16 %v769, %v768
        %786 = vmatprep.subr.bf16.mxu0 0
        %787 = vmatpush1.bf16.msra.mxu0 %v770
        %788 = vmatprep.subr.bf16.mxu0 0
        %789 = vmatpush1.bf16.msra.mxu0 %v771
        %790 = vmatprep.subr.bf16.mxu0 0
        %791 = vmatpush1.bf16.msra.mxu0 %v772
        %792 = vmatprep.subr.bf16.mxu0 0
        %793 = vmatpush1.bf16.msra.mxu0 %v773
        %794 = vmatprep.subr.bf16.mxu0 0
        %795 = vmatpush1.bf16.msra.mxu0 %v774
        %796 = vmatprep.subr.bf16.mxu0 0
        %797 = vmatpush1.bf16.msra.mxu0 %v775
        %798 = vmatprep.subr.bf16.mxu0 0
        %799 = vmatpush1.bf16.msra.mxu0 %v776
        %800 = vmatprep.subr.bf16.mxu0 0
        %801 = vmatpush1.bf16.msra.mxu0 %v777
        %802 = vmatprep.subr.bf16.mxu0 0
        %803 = vmatpush1.bf16.msra.mxu0 0
        %804 = vmatprep.subr.bf16.mxu0 0
        %805 = vmatpush1.bf16.msra.mxu0 0
        %806 = vmatprep.subr.bf16.mxu0 0
        %807 = vmatpush1.bf16.msra.mxu0 0
        %808 = vmatprep.subr.bf16.mxu0 0
        %809 = vmatpush1.bf16.msra.mxu0 0
        %810 = vmatprep.subr.bf16.mxu0 0
        %811 = vmatpush1.bf16.msra.mxu0 0
        %812 = vmatprep.subr.bf16.mxu0 0
        %813 = vmatpush1.bf16.msra.mxu0 0
        %814 = vmatprep.subr.bf16.mxu0 0
        %815 = vmatpush1.bf16.msra.mxu0 0
        %816 = vmatprep.subr.bf16.mxu0 0
        %817 = vmatpush1.bf16.msra.mxu0 0
        %818 = vmatprep.mubr.bf16.mxu0 0
        %819 = vmatmul.mubr.bf16.gmra.mrb[0].mxu0 %v714
        %v820 = vpop.f32.mrb[0].mxu0
        %v821 = vadd.f32 %v736, %v820
        %v822 = vpop.f32.mrb[0].mxu0
        %v823 = vpop.f32.mrb[0].mxu0
        %v824 = vpop.f32.mrb[0].mxu0
        %825 = vdwg.mxu0
        %v826 = vmax.f32 %v821, 0.0
        %v827 = vpack.c.bf16 %v826, %v826
        %v828 = vld [vmem:[%s9] sm:$0xf]
        %v829 = vld [vmem:[%s9 + $0x4] sm:$0xf]
        %v830 = vld [vmem:[%s9 + $0x8] sm:$0xf]
        %v831 = vld [vmem:[%s9 + $0xc] sm:$0xf]
        %v832 = vld [vmem:[%s9 + $0x10] sm:$0xf]
        %v833 = vld [vmem:[%s9 + $0x14] sm:$0xf]
        %v834 = vld [vmem:[%s9 + $0x18] sm:$0xf]
        %v835 = vld [vmem:[%s9 + $0x1c] sm:$0xf]
        %v836 = vld [vmem:[%s9 + $0x20] sm:$0xf]
        %v837 = vld [vmem:[%s9 + $0x24] sm:$0xf]
        %v838 = vld [vmem:[%s9 + $0x28] sm:$0xf]
        %v839 = vld [vmem:[%s9 + $0x2c] sm:$0xf]
        %v840 = vld [vmem:[%s9 + $0x30] sm:$0xf]
        %v841 = vld [vmem:[%s9 + $0x34] sm:$0xf]
        %v842 = vld [vmem:[%s9 + $0x38] sm:$0xf]
        %v843 = vld [vmem:[%s9 + $0x3c] sm:$0xf]
        %v844 = vld [vmem:[%s10] sm:$0x1]
        %v846 = vlaneseq
        %v847 = vshrl.u32 %v846, 7
        %v848 = vsub.s32 0, %v847
        %v849 = vrot.slane %v844, %v848
        %v867 = vunpack.c.l.b16 %v828
        %v868 = vunpack.c.l.b16 %v829
        %v869 = vunpack.c.l.b16 %v830
        %v870 = vunpack.c.l.b16 %v831
        %v871 = vunpack.c.l.b16 %v832
        %v872 = vunpack.c.l.b16 %v833
        %v873 = vunpack.c.l.b16 %v834
        %v874 = vunpack.c.l.b16 %v835
        %v875 = vunpack.c.l.b16 %v836
        %v876 = vunpack.c.l.b16 %v837
        %v877 = vunpack.c.l.b16 %v838
        %v878 = vunpack.c.l.b16 %v839
        %v879 = vunpack.c.l.b16 %v840
        %v880 = vunpack.c.l.b16 %v841
        %v881 = vunpack.c.l.b16 %v842
        %v882 = vunpack.c.l.b16 %v843
        %v883 = vpack.c.b16 %v868, %v867
        %v884 = vpack.c.b16 %v870, %v869
        %v885 = vpack.c.b16 %v872, %v871
        %v886 = vpack.c.b16 %v874, %v873
        %v887 = vpack.c.b16 %v876, %v875
        %v888 = vpack.c.b16 %v878, %v877
        %v889 = vpack.c.b16 %v880, %v879
        %v890 = vpack.c.b16 %v882, %v881
        %899 = vmatprep.subr.bf16.mxu0 0
        %900 = vmatpush1.bf16.msra.mxu0 %v883
        %901 = vmatprep.subr.bf16.mxu0 0
        %902 = vmatpush1.bf16.msra.mxu0 %v884
        %903 = vmatprep.subr.bf16.mxu0 0
        %904 = vmatpush1.bf16.msra.mxu0 %v885
        %905 = vmatprep.subr.bf16.mxu0 0
        %906 = vmatpush1.bf16.msra.mxu0 %v886
        %907 = vmatprep.subr.bf16.mxu0 0
        %908 = vmatpush1.bf16.msra.mxu0 %v887
        %909 = vmatprep.subr.bf16.mxu0 0
        %910 = vmatpush1.bf16.msra.mxu0 %v888
        %911 = vmatprep.subr.bf16.mxu0 0
        %912 = vmatpush1.bf16.msra.mxu0 %v889
        %913 = vmatprep.subr.bf16.mxu0 0
        %914 = vmatpush1.bf16.msra.mxu0 %v890
        %915 = vmatprep.subr.bf16.mxu0 0
        %916 = vmatpush1.bf16.msra.mxu0 0
        %917 = vmatprep.subr.bf16.mxu0 0
        %918 = vmatpush1.bf16.msra.mxu0 0
        %919 = vmatprep.subr.bf16.mxu0 0
        %920 = vmatpush1.bf16.msra.mxu0 0
        %921 = vmatprep.subr.bf16.mxu0 0
        %922 = vmatpush1.bf16.msra.mxu0 0
        %923 = vmatprep.subr.bf16.mxu0 0
        %924 = vmatpush1.bf16.msra.mxu0 0
        %925 = vmatprep.subr.bf16.mxu0 0
        %926 = vmatpush1.bf16.msra.mxu0 0
        %927 = vmatprep.subr.bf16.mxu0 0
        %928 = vmatpush1.bf16.msra.mxu0 0
        %929 = vmatprep.subr.bf16.mxu0 0
        %930 = vmatpush1.bf16.msra.mxu0 0
        %931 = vmatprep.mubr.bf16.mxu0 0
        %932 = vmatmul.mubr.bf16.gmra.mrb[0].mxu0 %v827
        %v933 = vpop.f32.mrb[0].mxu0
        %v934 = vadd.f32 %v849, %v933
        %v935 = vpop.f32.mrb[0].mxu0
        %v936 = vpop.f32.mrb[0].mxu0
        %v937 = vpop.f32.mrb[0].mxu0
        %938 = vdwg.mxu0
        %vm939 = vcmask 64512
        %940 = vst.msk [vmem:[%s425] sm:$0xff] %vm939, %v934
        %p941 = scmp.lt.s32.totalorder %s24, 1
        %s942 = scalar_select %p941, %s24, 1
        %s943 = smul.addr %s942, 8
        %s944 = scalar_lea.vmem %s11, %s943
        // Predicated region
        $region77: #{tpu_custom_call.1} parent=63 // pred_check
          %p945 = pneg %p278
        $region78: #{tpu_custom_call.1} parent=63 // pred_check_branch
          %947 = sbr.rel (%p945) target = $region80
        $region79: #{tpu_custom_call.1} parent=63 // pred_region
          _
        $region80: #{tpu_custom_call.1} parent=63 // pred_fallthru
          _
      $region64: #{tpu_custom_call.1} parent=5 // pred_fallthru
        _
      %p948 = scmp.le.s32.totalorder 2, %s19
      // Predicated region
      $region81: #{tpu_custom_call.1} parent=5 // pred_check
        %p949 = pneg %p948
      $region82: #{tpu_custom_call.1} parent=5 // pred_check_branch
        %951 = sbr.rel (%p949) target = $region84
      $region83: #{tpu_custom_call.1} parent=5 // pred_region
        %s952 = ssub.s32 %s19, 2
        // Predicated region
        $region85: #{tpu_custom_call.1} parent=83 // pred_check
          %p953 = pneg %p284
        $region86: #{tpu_custom_call.1} parent=83 // pred_check_branch
          %955 = sbr.rel (%p953) target = $region88
        $region87: #{tpu_custom_call.1} parent=83 // pred_region
          %p956 = scmp.lt.s32.totalorder %s25, 1
          %s957 = scalar_select %p956, %s25, 1
          %s958 = smul.addr %s957, 8
          %s959 = scalar_lea.vmem %s11, %s958
        $region88: #{tpu_custom_call.1} parent=83 // pred_fallthru
          _
      $region84: #{tpu_custom_call.1} parent=5 // pred_fallthru
        _
    $region6: #{tpu_custom_call.1} parent=1 // loop_footer
      %s23 = sadd.s32 1, %s19
    $region7: #{tpu_custom_call.1} parent=1 // loop_footer_branch
      %18 = sbr.rel target = $region3
    $region8: #{tpu_custom_call.1} parent=1 // loop_exit
      _
    %960 = vsyncpa [#allocation3], 1
    %s961 = scalar_lea.sflag [#allocation3], 1
    %962 = vsyncpa %s961, 1
    %963 = vsyncpa [#allocation5], 1

</llo_original>
